<compile_context>
chip_gen: v6e
topology: v6e:2x2x1
jax: 0.10.0
libtpu: 0.0.40
codegen_flags: <defaults>
</compile_context>

<pallas_src>
import functools

import jax
import jax.numpy as jnp
from jax import lax
from jax.experimental import pallas as pl
from jax.experimental.pallas import tpu as pltpu


def _cdiv(a, b):
    return -(-a // b)


def _round_up(a, b):
    return _cdiv(a, b) * b


def _vmem_capacity_bytes():
    try:
        return int(pltpu.get_tpu_info().vmem_capacity_bytes)
    except Exception:
        return 64 * 1024 * 1024          # v7x-safe fallback


def _lane_align():
    # v6e / v7x MXUs are 256 wide; v4/v5e are 128 wide.
    try:
        kind = jax.devices()[0].device_kind.lower()
    except Exception:
        return 128
    return 256 if ("v6" in kind or "v7" in kind) else 128


def _conv_kernel(a_cur_ref, a_halo_ref, w_ref, b_ref, o_ref, win_ref, lhs_ref,
                 *, offsets, tile_rows, g, cin, relu):
    """One tile of `tile_rows` packed rows (g spatial positions per row).

    a_cur_ref:  (tile_rows, g*cin)            bf16  packed input, block i
    a_halo_ref: (halo_rows, g*cin)            bf16  first rows of block i+1
    w_ref:      (k*k*g*cin, g*cout_p)         bf16  block-diagonal weights
    b_ref:      (1, g*cout_p)                 f32   bias, tiled g times
    o_ref:      (tile_rows, g*cout_p)         f32   lane-packed output tile
    win_ref:    (tile_rows+halo_rows, g*cin)  bf16  scratch: cur ++ halo
    lhs_ref:    (tile_rows, k*k*g*cin)        bf16  scratch: folded im2col LHS
    """
    gc = g * cin

    # Stage tile + (small) halo contiguously so every shifted tap below is a
    # cheap static slice of one ref (ref slices are free views).
    win_ref[:tile_rows, :] = a_cur_ref[...]
    win_ref[tile_rows:, :] = a_halo_ref[...]

    # Build the folded im2col LHS.  In the packed layout a flattened-frame
    # shift of `off` decomposes into a sublane shift d = off // g and a lane
    # shift of rc = (off % g)*cin elements; the latter is expressed as two
    # static slice copies (Mosaic relayout does the lane rotation on the XLU).
    for t, off in enumerate(offsets):            # static k*k-tap loop
        d, r = divmod(off, g)
        c0 = t * gc
        if r == 0:
            lhs_ref[:, c0:c0 + gc] = win_ref[d:d + tile_rows, :]
        else:
            rc = r * cin
            lhs_ref[:, c0:c0 + gc - rc] = win_ref[d:d + tile_rows, rc:]
            lhs_ref[:, c0 + gc - rc:c0 + gc] = \
                win_ref[d + 1:d + 1 + tile_rows, :rc]

    # Single MXU contraction over all taps / input channels / group slots;
    # the MXU accumulates internally (no f32 accumulator VMEM round-trips).
    acc = jnp.dot(lhs_ref[...], w_ref[...], preferred_element_type=jnp.float32)
    acc = acc + b_ref[...]
    if relu:                                     # compile-time flag
        acc = jnp.maximum(acc, 0.0)
    o_ref[...] = acc.astype(o_ref.dtype)


def basic_conv_forward(x_nchw, weight_oihw, bias, *, stride=1, kernel_size=3,
                       relu=True, tile_rows_target=512):
    """Equivalent of BasicConv(in_c, out_c, kernel_size, stride, bias=True,
    norm=False, relu=relu, transpose=False).forward(x).

    x_nchw:      (N, Cin, H, W)     float32
    weight_oihw: (Cout, Cin, K, K)  float32 (PyTorch Conv2d layout)
    bias:        (Cout,)            float32
    returns:     (N, Cout, Ho, Wo)  float32
    """
    n, cin, h, w = x_nchw.shape
    cout = weight_oihw.shape[0]
    k = kernel_size
    kk = k * k
    pad = k // 2
    s = stride
    ho = (h + 2 * pad - k) // s + 1
    wo = (w + 2 * pad - k) // s + 1
    hp, wp = h + 2 * pad, w + 2 * pad

    # ---- lane-packing factors ----------------------------------------------
    if cout <= 128:
        cout_p = 1
        while cout_p < cout:                 # next divisor of 128 >= cout
            cout_p *= 2
        g = 128 // cout_p                    # spatial positions per output row
        # keep the block-diagonal weight matrix reasonably small
        while g > 1 and kk * (g * cin) * (g * cout_p) * 2 > (4 << 20):
            g //= 2
    else:
        g = 1
        cout_p = _round_up(cout, _lane_align())   # 256-align on v6e/v7x
    lanes = g * cout_p                       # output minor dim (128 for cout<=128)
    gc = g * cin                             # packed-input minor dim

    # ---- tap geometry --------------------------------------------------------
    # Flattened padded-frame offsets: tap (kh, kw) of position r reads
    # row r + kh*wp + kw.
    offsets = tuple(kh * wp + kw for kh in range(k) for kw in range(k))
    max_off = offsets[-1]
    needed_halo = max_off // g + 1           # packed rows needed past the tile
    needed_halo8 = _round_up(max(needed_halo, 8), 8)

    m0 = n * hp * wp                         # dense-frame positions
    mg = _cdiv(m0, g)                        # valid packed rows

    # ---- tile sizing (>= ~4 blocks for v7x megacore; VMEM-budget aware) ------
    vmem_cap = _vmem_capacity_bytes()
    tile_rows = min(tile_rows_target, _round_up(_cdiv(mg, 4), 8))
    tile_rows = max(tile_rows, needed_halo8)

    def per_step_vmem(tr):
        return (2 * tr * gc * 2              # a_cur (double-buffered), bf16
                + 2 * needed_halo8 * gc * 2  # halo blocks
                + 2 * kk * gc * lanes * 2    # weights (resident)
                + 2 * tr * lanes * 4         # output blocks, f32
                + (tr + needed_halo8) * gc * 2   # win scratch
                + tr * kk * gc * 2)          # lhs scratch

    while per_step_vmem(tile_rows) > (vmem_cap * 3) // 5 and tile_rows > needed_halo8:
        tile_rows = max(needed_halo8, _round_up(tile_rows // 2, 8))
    assert per_step_vmem(tile_rows) <= (vmem_cap * 4) // 5, "conv tile too large for VMEM"

    # halo block: smallest multiple of 8 >= needed_halo that divides tile_rows
    halo_rows = next(c for c in range(needed_halo8, tile_rows + 1, 8)
                     if tile_rows % c == 0)
    assert halo_rows >= needed_halo and tile_rows % halo_rows == 0

    num_blocks = _cdiv(mg, tile_rows)
    mg_alloc = (num_blocks + 1) * tile_rows  # +1 tile so the last halo block is in range
    ratio = tile_rows // halo_rows

    # ---- layout glue (fused by XLA): NCHW->NHWC, zero-pad, flatten, pack -----
    x_nhwc = jnp.transpose(x_nchw, (0, 2, 3, 1))
    xp = jnp.pad(x_nhwc, ((0, 0), (pad, pad), (pad, pad), (0, 0)))
    a = xp.reshape(m0, cin).astype(jnp.bfloat16)
    a = jnp.pad(a, ((0, mg_alloc * g - m0), (0, 0))).reshape(mg_alloc, gc)

    # ---- weights: (Cout,Cin,K,K) -> block-diagonal (kk*g*cin, g*cout_p) ------
    w_t = jnp.transpose(weight_oihw, (2, 3, 1, 0)).reshape(kk, cin, cout)
    w_t = jnp.pad(w_t, ((0, 0), (0, 0), (0, cout_p - cout)))
    w_big = jnp.einsum('qp,tcd->tqcpd', jnp.eye(g, dtype=w_t.dtype), w_t)
    w_big = w_big.reshape(kk * gc, lanes).astype(jnp.bfloat16)

    bias_p = jnp.pad(bias.astype(jnp.float32), (0, cout_p - cout))
    bias_p = jnp.tile(bias_p, (g,)).reshape(1, lanes)

    kern = functools.partial(_conv_kernel, offsets=offsets, tile_rows=tile_rows,
                             g=g, cin=cin, relu=bool(relu))

    cost = pl.CostEstimate(
        flops=2 * num_blocks * tile_rows * (kk * gc) * lanes,
        transcendentals=0,
        bytes_accessed=(num_blocks * (tile_rows + halo_rows) * gc * 2
                        + w_big.size * 2 + bias_p.size * 4
                        + num_blocks * tile_rows * lanes * 4))

    out = pl.pallas_call(
        kern,
        out_shape=jax.ShapeDtypeStruct((num_blocks * tile_rows, lanes),
                                       jnp.float32),
        grid_spec=pltpu.PrefetchScalarGridSpec(
            num_scalar_prefetch=0,
            grid=(num_blocks,),
            in_specs=[
                pl.BlockSpec((tile_rows, gc), lambda i: (i, 0)),          # tile
                pl.BlockSpec((halo_rows, gc),
                             lambda i: ((i + 1) * ratio, 0)),             # halo
                pl.BlockSpec((kk * gc, lanes), lambda i: (0, 0)),         # W
                pl.BlockSpec((1, lanes), lambda i: (0, 0)),               # bias
            ],
            out_specs=pl.BlockSpec((tile_rows, lanes), lambda i: (i, 0)),
            scratch_shapes=[
                pltpu.VMEM((tile_rows + halo_rows, gc), jnp.bfloat16),    # win
                pltpu.VMEM((tile_rows, kk * gc), jnp.bfloat16),           # lhs
            ]),
        compiler_params=pltpu.CompilerParams(
            dimension_semantics=("parallel",),
            vmem_limit_bytes=int(min(vmem_cap * 3 // 4,
                                     max(32 * 1024 * 1024,
                                         2 * per_step_vmem(tile_rows))))),
        cost_estimate=cost,
    )(a, a, w_big, bias_p)

    # ---- unpack: (mg, g*cout_p) -> dense frame -> strided output gather ------
    frame = out[:mg].reshape(mg * g, cout_p)[:m0, :cout].reshape(n, hp, wp, cout)
    out_nhwc = frame[:, 0:(ho - 1) * s + 1:s, 0:(wo - 1) * s + 1:s, :]
    return jnp.transpose(out_nhwc, (0, 3, 1, 2))   # NHWC -> NCHW (PyTorch)


def _reference(x, w, b, *, stride, pad, relu=True):
    # The kernel feeds bf16 operands to the MXU with f32 accumulation; round
    # the reference inputs the same way so tolerances can stay tight.
    xr = x.astype(jnp.bfloat16).astype(jnp.float32)
    wr = w.astype(jnp.bfloat16).astype(jnp.float32)
    y = lax.conv_general_dilated(
        xr, wr,
        window_strides=(stride, stride),
        padding=[(pad, pad), (pad, pad)],
        dimension_numbers=("NCHW", "OIHW", "NCHW"),
        preferred_element_type=jnp.float32,
    )
    y = y + b.reshape(1, -1, 1, 1)
    if relu:
        y = jnp.maximum(y, 0.0)
    return y


if __name__ == "__main__":
    # BasicConv(in_channel=4, out_channel=8, kernel_size=3, stride=1,
    #           bias=True, norm=False, relu=True, transpose=False)
    N, CIN, H, W = 2, 4, 16, 16
    COUT, K = 8, 3

    key = jax.random.PRNGKey(0)
    kx, kw_, kb = jax.random.split(key, 3)
    x = jax.random.normal(kx, (N, CIN, H, W), dtype=jnp.float32)
    weight = jax.random.normal(kw_, (COUT, CIN, K, K), dtype=jnp.float32) * 0.1
    bias = jax.random.normal(kb, (COUT,), dtype=jnp.float32) * 0.1

    # (stride, relu) configs: module default, relu=False path, strided path.
    for stride_, relu_ in ((1, True), (1, False), (2, True)):
        fwd = jax.jit(functools.partial(basic_conv_forward, stride=stride_,
                                        kernel_size=K, relu=relu_))
        out = jax.block_until_ready(fwd(x, weight, bias))
        ref = _reference(x, weight, bias, stride=stride_, pad=K // 2, relu=relu_)
        assert out.shape == ref.shape, (out.shape, ref.shape)
        err = float(jnp.max(jnp.abs(out - ref)))
        assert jnp.allclose(out, ref, atol=2e-3, rtol=2e-3), (stride_, relu_, err)

    print("KERNEL_OK")
</pallas_src>

<mosaic_0001>
module attributes {stable_mosaic.version = 11 : i64} {
  func.func @_conv_kernel(%arg0: i32, %arg1: memref<16x64xbf16, #tpu.memory_space<vmem>>, %arg2: memref<8x64xbf16, #tpu.memory_space<vmem>>, %arg3: memref<576x128xbf16, #tpu.memory_space<vmem>>, %arg4: memref<1x128xf32, #tpu.memory_space<vmem>>, %arg5: memref<16x128xf32, #tpu.memory_space<vmem>>, %arg6: memref<24x64xbf16, #tpu.memory_space<vmem>>, %arg7: memref<16x576xbf16, #tpu.memory_space<vmem>>) attributes {dimension_semantics = [#tpu.dimension_semantics<parallel>], iteration_bounds = array<i64: 3>, scalar_prefetch = 0 : i64, scratch_operands = 2 : i64, tpu.core_type = #tpu.core_type<tc>, window_params = [{transform_indices = @transform_0, window_bounds = array<i64: 16, 64>}, {transform_indices = @transform_1, window_bounds = array<i64: 8, 64>}, {pipeline_mode = #tpu.pipeline_mode<synchronous>, transform_indices = @transform_2, window_bounds = array<i64: 576, 128>}, {pipeline_mode = #tpu.pipeline_mode<synchronous>, transform_indices = @transform_3, window_bounds = array<i64: 1, 128>}, {transform_indices = @transform_4, window_bounds = array<i64: 16, 128>}]} {
    %c0 = arith.constant 0 : index
    %c0_0 = arith.constant 0 : index
    %0 = vector.load %arg1[%c0, %c0_0] : memref<16x64xbf16, #tpu.memory_space<vmem>>, vector<16x64xbf16>
    %c0_1 = arith.constant 0 : index
    %c0_2 = arith.constant 0 : index
    %1 = vector.load %arg6[%c0_1, %c0_2] : memref<24x64xbf16, #tpu.memory_space<vmem>>, vector<16x64xbf16>
    tpu.vector_store %arg6[%c0_1, %c0_2], %0 {strides = array<i32>} : memref<24x64xbf16, #tpu.memory_space<vmem>>, vector<16x64xbf16>,
    %c0_3 = arith.constant 0 : index
    %c0_4 = arith.constant 0 : index
    %2 = vector.load %arg2[%c0_3, %c0_4] : memref<8x64xbf16, #tpu.memory_space<vmem>>, vector<8x64xbf16>
    %c16 = arith.constant 16 : index
    %c0_5 = arith.constant 0 : index
    %3 = vector.load %arg6[%c16, %c0_5] : memref<24x64xbf16, #tpu.memory_space<vmem>>, vector<8x64xbf16>
    tpu.vector_store %arg6[%c16, %c0_5], %2 {strides = array<i32>} : memref<24x64xbf16, #tpu.memory_space<vmem>>, vector<8x64xbf16>,
    %c0_6 = arith.constant 0 : index
    %c0_7 = arith.constant 0 : index
    %4 = vector.load %arg6[%c0_6, %c0_7] : memref<24x64xbf16, #tpu.memory_space<vmem>>, vector<16x64xbf16>
    %c0_8 = arith.constant 0 : index
    %c0_9 = arith.constant 0 : index
    %5 = vector.load %arg7[%c0_8, %c0_9] : memref<16x576xbf16, #tpu.memory_space<vmem>>, vector<16x64xbf16>
    tpu.vector_store %arg7[%c0_8, %c0_9], %4 {strides = array<i32>} : memref<16x576xbf16, #tpu.memory_space<vmem>>, vector<16x64xbf16>,
    %c0_10 = arith.constant 0 : index
    %c4 = arith.constant 4 : index
    %6 = vector.load %arg6[%c0_10, %c4] : memref<24x64xbf16, #tpu.memory_space<vmem>>, vector<16x60xbf16>
    %c0_11 = arith.constant 0 : index
    %c64 = arith.constant 64 : index
    %7 = vector.load %arg7[%c0_11, %c64] : memref<16x576xbf16, #tpu.memory_space<vmem>>, vector<16x60xbf16>
    tpu.vector_store %arg7[%c0_11, %c64], %6 {strides = array<i32>} : memref<16x576xbf16, #tpu.memory_space<vmem>>, vector<16x60xbf16>,
    %c1 = arith.constant 1 : index
    %c0_12 = arith.constant 0 : index
    %8 = vector.load %arg6[%c1, %c0_12] : memref<24x64xbf16, #tpu.memory_space<vmem>>, vector<16x4xbf16>
    %c0_13 = arith.constant 0 : index
    %c124 = arith.constant 124 : index
    %9 = vector.load %arg7[%c0_13, %c124] : memref<16x576xbf16, #tpu.memory_space<vmem>>, vector<16x4xbf16>
    tpu.vector_store %arg7[%c0_13, %c124], %8 {strides = array<i32>} : memref<16x576xbf16, #tpu.memory_space<vmem>>, vector<16x4xbf16>,
    %c0_14 = arith.constant 0 : index
    %c8 = arith.constant 8 : index
    %10 = vector.load %arg6[%c0_14, %c8] : memref<24x64xbf16, #tpu.memory_space<vmem>>, vector<16x56xbf16>
    %c0_15 = arith.constant 0 : index
    %c128 = arith.constant 128 : index
    %11 = vector.load %arg7[%c0_15, %c128] : memref<16x576xbf16, #tpu.memory_space<vmem>>, vector<16x56xbf16>
    tpu.vector_store %arg7[%c0_15, %c128], %10 {strides = array<i32>} : memref<16x576xbf16, #tpu.memory_space<vmem>>, vector<16x56xbf16>,
    %c1_16 = arith.constant 1 : index
    %c0_17 = arith.constant 0 : index
    %12 = vector.load %arg6[%c1_16, %c0_17] : memref<24x64xbf16, #tpu.memory_space<vmem>>, vector<16x8xbf16>
    %c0_18 = arith.constant 0 : index
    %c184 = arith.constant 184 : index
    %13 = vector.load %arg7[%c0_18, %c184] : memref<16x576xbf16, #tpu.memory_space<vmem>>, vector<16x8xbf16>
    tpu.vector_store %arg7[%c0_18, %c184], %12 {strides = array<i32>} : memref<16x576xbf16, #tpu.memory_space<vmem>>, vector<16x8xbf16>,
    %c1_19 = arith.constant 1 : index
    %c8_20 = arith.constant 8 : index
    %14 = vector.load %arg6[%c1_19, %c8_20] : memref<24x64xbf16, #tpu.memory_space<vmem>>, vector<16x56xbf16>
    %c0_21 = arith.constant 0 : index
    %c192 = arith.constant 192 : index
    %15 = vector.load %arg7[%c0_21, %c192] : memref<16x576xbf16, #tpu.memory_space<vmem>>, vector<16x56xbf16>
    tpu.vector_store %arg7[%c0_21, %c192], %14 {strides = array<i32>} : memref<16x576xbf16, #tpu.memory_space<vmem>>, vector<16x56xbf16>,
    %c2 = arith.constant 2 : index
    %c0_22 = arith.constant 0 : index
    %16 = vector.load %arg6[%c2, %c0_22] : memref<24x64xbf16, #tpu.memory_space<vmem>>, vector<16x8xbf16>
    %c0_23 = arith.constant 0 : index
    %c248 = arith.constant 248 : index
    %17 = vector.load %arg7[%c0_23, %c248] : memref<16x576xbf16, #tpu.memory_space<vmem>>, vector<16x8xbf16>
    tpu.vector_store %arg7[%c0_23, %c248], %16 {strides = array<i32>} : memref<16x576xbf16, #tpu.memory_space<vmem>>, vector<16x8xbf16>,
    %c1_24 = arith.constant 1 : index
    %c12 = arith.constant 12 : index
    %18 = vector.load %arg6[%c1_24, %c12] : memref<24x64xbf16, #tpu.memory_space<vmem>>, vector<16x52xbf16>
    %c0_25 = arith.constant 0 : index
    %c256 = arith.constant 256 : index
    %19 = vector.load %arg7[%c0_25, %c256] : memref<16x576xbf16, #tpu.memory_space<vmem>>, vector<16x52xbf16>
    tpu.vector_store %arg7[%c0_25, %c256], %18 {strides = array<i32>} : memref<16x576xbf16, #tpu.memory_space<vmem>>, vector<16x52xbf16>,
    %c2_26 = arith.constant 2 : index
    %c0_27 = arith.constant 0 : index
    %20 = vector.load %arg6[%c2_26, %c0_27] : memref<24x64xbf16, #tpu.memory_space<vmem>>, vector<16x12xbf16>
    %c0_28 = arith.constant 0 : index
    %c308 = arith.constant 308 : index
    %21 = vector.load %arg7[%c0_28, %c308] : memref<16x576xbf16, #tpu.memory_space<vmem>>, vector<16x12xbf16>
    tpu.vector_store %arg7[%c0_28, %c308], %20 {strides = array<i32>} : memref<16x576xbf16, #tpu.memory_space<vmem>>, vector<16x12xbf16>,
    %c1_29 = arith.constant 1 : index
    %c16_30 = arith.constant 16 : index
    %22 = vector.load %arg6[%c1_29, %c16_30] : memref<24x64xbf16, #tpu.memory_space<vmem>>, vector<16x48xbf16>
    %c0_31 = arith.constant 0 : index
    %c320 = arith.constant 320 : index
    %23 = vector.load %arg7[%c0_31, %c320] : memref<16x576xbf16, #tpu.memory_space<vmem>>, vector<16x48xbf16>
    tpu.vector_store %arg7[%c0_31, %c320], %22 {strides = array<i32>} : memref<16x576xbf16, #tpu.memory_space<vmem>>, vector<16x48xbf16>,
    %c2_32 = arith.constant 2 : index
    %c0_33 = arith.constant 0 : index
    %24 = vector.load %arg6[%c2_32, %c0_33] : memref<24x64xbf16, #tpu.memory_space<vmem>>, vector<16x16xbf16>
    %c0_34 = arith.constant 0 : index
    %c368 = arith.constant 368 : index
    %25 = vector.load %arg7[%c0_34, %c368] : memref<16x576xbf16, #tpu.memory_space<vmem>>, vector<16x16xbf16>
    tpu.vector_store %arg7[%c0_34, %c368], %24 {strides = array<i32>} : memref<16x576xbf16, #tpu.memory_space<vmem>>, vector<16x16xbf16>,
    %c2_35 = arith.constant 2 : index
    %c16_36 = arith.constant 16 : index
    %26 = vector.load %arg6[%c2_35, %c16_36] : memref<24x64xbf16, #tpu.memory_space<vmem>>, vector<16x48xbf16>
    %c0_37 = arith.constant 0 : index
    %c384 = arith.constant 384 : index
    %27 = vector.load %arg7[%c0_37, %c384] : memref<16x576xbf16, #tpu.memory_space<vmem>>, vector<16x48xbf16>
    tpu.vector_store %arg7[%c0_37, %c384], %26 {strides = array<i32>} : memref<16x576xbf16, #tpu.memory_space<vmem>>, vector<16x48xbf16>,
    %c3 = arith.constant 3 : index
    %c0_38 = arith.constant 0 : index
    %28 = vector.load %arg6[%c3, %c0_38] : memref<24x64xbf16, #tpu.memory_space<vmem>>, vector<16x16xbf16>
    %c0_39 = arith.constant 0 : index
    %c432 = arith.constant 432 : index
    %29 = vector.load %arg7[%c0_39, %c432] : memref<16x576xbf16, #tpu.memory_space<vmem>>, vector<16x16xbf16>
    tpu.vector_store %arg7[%c0_39, %c432], %28 {strides = array<i32>} : memref<16x576xbf16, #tpu.memory_space<vmem>>, vector<16x16xbf16>,
    %c2_40 = arith.constant 2 : index
    %c20 = arith.constant 20 : index
    %30 = vector.load %arg6[%c2_40, %c20] : memref<24x64xbf16, #tpu.memory_space<vmem>>, vector<16x44xbf16>
    %c0_41 = arith.constant 0 : index
    %c448 = arith.constant 448 : index
    %31 = vector.load %arg7[%c0_41, %c448] : memref<16x576xbf16, #tpu.memory_space<vmem>>, vector<16x44xbf16>
    tpu.vector_store %arg7[%c0_41, %c448], %30 {strides = array<i32>} : memref<16x576xbf16, #tpu.memory_space<vmem>>, vector<16x44xbf16>,
    %c3_42 = arith.constant 3 : index
    %c0_43 = arith.constant 0 : index
    %32 = vector.load %arg6[%c3_42, %c0_43] : memref<24x64xbf16, #tpu.memory_space<vmem>>, vector<16x20xbf16>
    %c0_44 = arith.constant 0 : index
    %c492 = arith.constant 492 : index
    %33 = vector.load %arg7[%c0_44, %c492] : memref<16x576xbf16, #tpu.memory_space<vmem>>, vector<16x20xbf16>
    tpu.vector_store %arg7[%c0_44, %c492], %32 {strides = array<i32>} : memref<16x576xbf16, #tpu.memory_space<vmem>>, vector<16x20xbf16>,
    %c2_45 = arith.constant 2 : index
    %c24 = arith.constant 24 : index
    %34 = vector.load %arg6[%c2_45, %c24] : memref<24x64xbf16, #tpu.memory_space<vmem>>, vector<16x40xbf16>
    %c0_46 = arith.constant 0 : index
    %c512 = arith.constant 512 : index
    %35 = vector.load %arg7[%c0_46, %c512] : memref<16x576xbf16, #tpu.memory_space<vmem>>, vector<16x40xbf16>
    tpu.vector_store %arg7[%c0_46, %c512], %34 {strides = array<i32>} : memref<16x576xbf16, #tpu.memory_space<vmem>>, vector<16x40xbf16>,
    %c3_47 = arith.constant 3 : index
    %c0_48 = arith.constant 0 : index
    %36 = vector.load %arg6[%c3_47, %c0_48] : memref<24x64xbf16, #tpu.memory_space<vmem>>, vector<16x24xbf16>
    %c0_49 = arith.constant 0 : index
    %c552 = arith.constant 552 : index
    %37 = vector.load %arg7[%c0_49, %c552] : memref<16x576xbf16, #tpu.memory_space<vmem>>, vector<16x24xbf16>
    tpu.vector_store %arg7[%c0_49, %c552], %36 {strides = array<i32>} : memref<16x576xbf16, #tpu.memory_space<vmem>>, vector<16x24xbf16>,
    %c0_50 = arith.constant 0 : index
    %c0_51 = arith.constant 0 : index
    %38 = vector.load %arg7[%c0_50, %c0_51] : memref<16x576xbf16, #tpu.memory_space<vmem>>, vector<16x576xbf16>
    %c0_52 = arith.constant 0 : index
    %c0_53 = arith.constant 0 : index
    %39 = vector.load %arg3[%c0_52, %c0_53] : memref<576x128xbf16, #tpu.memory_space<vmem>>, vector<576x128xbf16>
    %cst = arith.constant dense<0.000000e+00> : vector<16x128xf32>
    %40 = tpu.matmul %38, %39, %cst {dimension_numbers = #tpu.dot_dimension_numbers<[1], [0], [0], [1], [0, 0, 1, 1], [], []>} : vector<16x576xbf16>, vector<576x128xbf16>, vector<16x128xf32> -> vector<16x128xf32>
    %c0_54 = arith.constant 0 : index
    %c0_55 = arith.constant 0 : index
    %41 = vector.load %arg4[%c0_54, %c0_55] : memref<1x128xf32, #tpu.memory_space<vmem>>, vector<1x128xf32>
    %42 = vector.broadcast %41 : vector<1x128xf32> to vector<16x128xf32>
    %43 = arith.addf %40, %42 : vector<16x128xf32>
    %cst_56 = arith.constant 0.000000e+00 : f32
    %44 = vector.broadcast %cst_56 : f32 to vector<16x128xf32>
    %45 = arith.maximumf %43, %44 : vector<16x128xf32>
    %c0_57 = arith.constant 0 : index
    %c0_58 = arith.constant 0 : index
    %46 = vector.load %arg5[%c0_57, %c0_58] : memref<16x128xf32, #tpu.memory_space<vmem>>, vector<16x128xf32>
    tpu.vector_store %arg5[%c0_57, %c0_58], %45 {strides = array<i32>} : memref<16x128xf32, #tpu.memory_space<vmem>>, vector<16x128xf32>,
    return
  }
  func.func @transform_0(%arg0: i32) -> (i32, i32) {
    %c0_i32 = arith.constant 0 : i32
    %c0_i32_0 = arith.constant 0 : i32
    return %arg0, %c0_i32 : i32, i32
  }
  func.func @transform_1(%arg0: i32) -> (i32, i32) {
    %c1_i32 = arith.constant 1 : i32
    %0 = arith.addi %arg0, %c1_i32 : i32
    %c2_i32 = arith.constant 2 : i32
    %1 = arith.muli %0, %c2_i32 : i32
    %c0_i32 = arith.constant 0 : i32
    %c0_i32_0 = arith.constant 0 : i32
    return %1, %c0_i32 : i32, i32
  }
  func.func @transform_2(%arg0: i32) -> (i32, i32) {
    %c0_i32 = arith.constant 0 : i32
    %c0_i32_0 = arith.constant 0 : i32
    %c0_i32_1 = arith.constant 0 : i32
    return %c0_i32, %c0_i32_0 : i32, i32
  }
  func.func @transform_3(%arg0: i32) -> (i32, i32) {
    %c0_i32 = arith.constant 0 : i32
    %c0_i32_0 = arith.constant 0 : i32
    %c0_i32_1 = arith.constant 0 : i32
    return %c0_i32, %c0_i32_0 : i32, i32
  }
  func.func @transform_4(%arg0: i32) -> (i32, i32) {
    %c0_i32 = arith.constant 0 : i32
    %c0_i32_0 = arith.constant 0 : i32
    return %arg0, %c0_i32 : i32, i32
  }
}

</mosaic_0001>

<llo_original>
// kernel: tile.8
$region0: #{tile.8}
  #allocation0 [shape = 's32[1]{0}', space=sflag, size = 0x4, scoped, tag = 'scoped memory for tile.8']
  %s0 = inlined_call_operand.vmem [shape: f32[8], index: 0, kind: input, shape index: {}]
  %s1 = inlined_call_operand.vmem [shape: f32[16,8], index: 1, kind: output, shape index: {}]
  // Predicated region
  $region2: #{tile.8} parent=0 // pred_check
    _
  $region3: #{tile.8} parent=0 // pred_check_branch
    %3 = sbr.rel (0) target = $region5
  $region4: #{tile.8} parent=0 // pred_region
    _
  $region5: #{tile.8} parent=0 // pred_fallthru
    _
  %v4 = vld [vmem:[%s0] ss:$0 sm:$0xff]
  %5 = vst [vmem:[%s1] sm:$0xff] %v4
  %s6 = scalar_lea.vmem %s1, 8
  %7 = vst [vmem:[%s6] sm:$0xff] %v4

// kernel: tile.9
$region0: #{tile.9}
  %s0 = inlined_call_operand.vmem [shape: f32[16,8], index: 0, kind: input, shape index: {}]
  %s1 = inlined_call_operand.vmem [shape: f32[1,128], index: 1, kind: output, shape index: {}]
  $region1: #{tile.9} parent=0
    #allocation0 [shape = 'u8[4096]{0}', space=vmem, size = 0x1000, scoped, tag = 'scoped mem for output reshape']
    %v2 = vld [vmem:[%s0] sm:$0x1]
    %vm3 = vcmask 64512
    %4 = vst.msk [vmem:[#allocation0] sm:$0x1] %vm3, %v2
    %s5 = scalar_lea.vmem %s0, 15
    %v6 = vld [vmem:[%s5] sm:$0x1]
    %7 = vrot.lane.b32.xlu0 %v6, 120
    %v8 = vpop.permute.xlu0 %7
    %vm9 = vcmask 1048512
    %10 = vst.msk [vmem:[#allocation0] sm:$0x1] %vm9, %v8
    %s11 = scalar_lea.vmem %s0, 14
    %v12 = vld [vmem:[%s11] sm:$0x1]
    %13 = vrot.lane.b32.xlu0 %v12, 112
    %v14 = vpop.permute.xlu0 %13
    %vm15 = vcmask 982912
    %16 = vst.msk [vmem:[#allocation0] sm:$0x1] %vm15, %v14
    %s17 = scalar_lea.vmem %s0, 13
    %v18 = vld [vmem:[%s17] sm:$0x1]
    %19 = vrot.lane.b32.xlu0 %v18, 104
    %v20 = vpop.permute.xlu0 %19
    %vm21 = vcmask 917312
    %22 = vst.msk [vmem:[#allocation0] sm:$0x1] %vm21, %v20
    %s23 = scalar_lea.vmem %s0, 12
    %v24 = vld [vmem:[%s23] sm:$0x1]
    %25 = vrot.lane.b32.xlu0 %v24, 96
    %v26 = vpop.permute.xlu0 %25
    %vm27 = vcmask 851712
    %28 = vst.msk [vmem:[#allocation0] sm:$0x1] %vm27, %v26
    %s29 = scalar_lea.vmem %s0, 11
    %v30 = vld [vmem:[%s29] sm:$0x1]
    %31 = vrot.lane.b32.xlu0 %v30, 88
    %v32 = vpop.permute.xlu0 %31
    %vm33 = vcmask 786112
    %34 = vst.msk [vmem:[#allocation0] sm:$0x1] %vm33, %v32
    %s35 = scalar_lea.vmem %s0, 10
    %v36 = vld [vmem:[%s35] sm:$0x1]
    %37 = vrot.lane.b32.xlu0 %v36, 80
    %v38 = vpop.permute.xlu0 %37
    %vm39 = vcmask 720512
    %40 = vst.msk [vmem:[#allocation0] sm:$0x1] %vm39, %v38
    %s41 = scalar_lea.vmem %s0, 9
    %v42 = vld [vmem:[%s41] sm:$0x1]
    %43 = vrot.lane.b32.xlu0 %v42, 72
    %v44 = vpop.permute.xlu0 %43
    %vm45 = vcmask 654912
    %46 = vst.msk [vmem:[#allocation0] sm:$0x1] %vm45, %v44
    %s47 = scalar_lea.vmem %s0, 8
    %v48 = vld [vmem:[%s47] sm:$0x1]
    %49 = vrot.lane.b32.xlu0 %v48, 64
    %v50 = vpop.permute.xlu0 %49
    %vm51 = vcmask 589312
    %52 = vst.msk [vmem:[#allocation0] sm:$0x1] %vm51, %v50
    %s53 = scalar_lea.vmem %s0, 7
    %v54 = vld [vmem:[%s53] sm:$0x1]
    %55 = vrot.lane.b32.xlu0 %v54, 56
    %v56 = vpop.permute.xlu0 %55
    %vm57 = vcmask 523712
    %58 = vst.msk [vmem:[#allocation0] sm:$0x1] %vm57, %v56
    %s59 = scalar_lea.vmem %s0, 6
    %v60 = vld [vmem:[%s59] sm:$0x1]
    %61 = vrot.lane.b32.xlu0 %v60, 48
    %v62 = vpop.permute.xlu0 %61
    %vm63 = vcmask 458112
    %64 = vst.msk [vmem:[#allocation0] sm:$0x1] %vm63, %v62
    %s65 = scalar_lea.vmem %s0, 5
    %v66 = vld [vmem:[%s65] sm:$0x1]
    %67 = vrot.lane.b32.xlu0 %v66, 40
    %v68 = vpop.permute.xlu0 %67
    %vm69 = vcmask 392512
    %70 = vst.msk [vmem:[#allocation0] sm:$0x1] %vm69, %v68
    %s71 = scalar_lea.vmem %s0, 4
    %v72 = vld [vmem:[%s71] sm:$0x1]
    %73 = vrot.lane.b32.xlu0 %v72, 32
    %v74 = vpop.permute.xlu0 %73
    %vm75 = vcmask 326912
    %76 = vst.msk [vmem:[#allocation0] sm:$0x1] %vm75, %v74
    %s77 = scalar_lea.vmem %s0, 3
    %v78 = vld [vmem:[%s77] sm:$0x1]
    %79 = vrot.lane.b32.xlu0 %v78, 24
    %v80 = vpop.permute.xlu0 %79
    %vm81 = vcmask 261312
    %82 = vst.msk [vmem:[#allocation0] sm:$0x1] %vm81, %v80
    %s83 = scalar_lea.vmem %s0, 2
    %v84 = vld [vmem:[%s83] sm:$0x1]
    %85 = vrot.lane.b32.xlu0 %v84, 16
    %v86 = vpop.permute.xlu0 %85
    %vm87 = vcmask 195712
    %88 = vst.msk [vmem:[#allocation0] sm:$0x1] %vm87, %v86
    %s89 = scalar_lea.vmem %s0, 1
    %v90 = vld [vmem:[%s89] sm:$0x1]
    %91 = vrot.lane.b32.xlu0 %v90, 8
    %v92 = vpop.permute.xlu0 %91
    %vm93 = vcmask 130112
    %94 = vst.msk [vmem:[#allocation0] sm:$0x1] %vm93, %v92
    %s96 = sshll.u32 1, 1
    %s97 = ssub.s32 %s96, 1
    %v99 = vld [vmem:[#allocation0] sm:%s97]
    %s100 = sshll.u32 1, 1
    %s101 = ssub.s32 %s100, 1
    %102 = vst [vmem:[%s1] sm:%s101] %v99

// kernel: basic_conv_forward.1
$region0: #{basic_conv_forward.1}
  #allocation0 [shape = 'u32[]', space=smem, size = 0x4, offset = 0x4, fixed_abs, tag = 'smem constant byte address 0x4 - core index']
  #allocation1 [shape = 'u32[144,128]{1,0:T(1,128)}', space=vmem, size = 0x12000, scoped, tag = 'internal scratch']
  #allocation2 [shape = 'bf16[24,64]{1,0:T(8,128)(2,1)}', space=vmem, size = 0x1800, scoped, tag = 'scratch operand']
  #allocation3 [shape = 'bf16[16,576]{1,0:T(8,128)(2,1)}', space=vmem, size = 0x5000, scoped, tag = 'scratch operand']
  %s0 = inlined_call_operand.vmem [shape: bf16[64,64], index: 0, kind: input, shape index: {}, may-alias: {0,1}]
  %s1 = inlined_call_operand.vmem [shape: bf16[64,64], index: 1, kind: input, shape index: {}, may-alias: {0,1}]
  %s2 = inlined_call_operand.vmem [shape: bf16[576,128], index: 2, kind: input, shape index: {}]
  %s3 = inlined_call_operand.vmem [shape: f32[1,128], index: 3, kind: input, shape index: {}]
  %s4 = inlined_call_operand.vmem [shape: f32[48,128], index: 4, kind: output, shape index: {}]
  %s5 = sld [smem:[#allocation0]]
  $region49: #{basic_conv_forward.1} parent=0
    _
  %s7 = ssub.s32 1, %s5
  %s8 = scalar_select 0, %s7, %s5
  loop: start=0, step=1, limit=5
  $region2: #{basic_conv_forward.1} parent=0 // loop_pre_header
    _
  $region3: #{basic_conv_forward.1} parent=0 // loop_header
    %s10 = sphi 0, %s14
    %p11 = scmp.ge.s32.totalorder %s10, 5
    %s20 = sphi 0, %s22
    %s23 = sphi 0, %s20
    %s24 = sphi 0, %s23
    %s40 = sphi 0, %s24
    %s50 = sphi 0, %s52
    %s53 = sphi 0, %s50
    %s54 = sphi 0, %s53
    %s70 = sphi 0, %s54
    %s74 = sphi 0, %s74
    %s76 = sphi 0, %s74
    %s77 = sphi 0, %s76
    %s91 = sphi 0, %s77
    %s95 = sphi 0, %s95
    %s97 = sphi 0, %s95
    %s98 = sphi 0, %s97
    %s112 = sphi 0, %s98
    %s118 = sphi 0, %s120
    %s121 = sphi 0, %s118
    %s122 = sphi 0, %s121
    %s138 = sphi 0, %s122
  $region4: #{basic_conv_forward.1} parent=0 // loop_header_branch
    %13 = sbr.rel (%p11) target = $region8
  $region5: #{basic_conv_forward.1} parent=0 // loop_body
    %s15 = ssub.s32 %s10, 1
    %s16 = ssub.s32 %s10, 2
    %s17 = sadd.s32 %s10, 1
    %s18 = ssub.s32 %s10, %s17
    %p19 = scmp.eq.s32.totalorder %s18, 0
    %s21 = sadd.s32 %s20, 1
    %s22 = scalar_select %p19, %s20, %s21
    %p25 = pneg %p19
    %p26 = scmp.eq.s32.totalorder %s10, 2
    %p27 = por %p25, %p26
    %p28 = scmp.ne.s32.totalorder %s20, %s23
    %p29 = scmp.eq.s32.totalorder %s10, 0
    %p30 = por %p28, %p29
    %p31 = scmp.ne.s32.totalorder %s20, %s23
    %p32 = scmp.eq.s32.totalorder %s15, 2
    %p33 = por %p31, %p32
    %p34 = scmp.ne.s32.totalorder %s23, %s24
    %p35 = scmp.eq.s32.totalorder %s15, 0
    %p36 = por %p34, %p35
    %p37 = scmp.ne.s32.totalorder %s23, %s24
    %p38 = scmp.eq.s32.totalorder %s16, 2
    %p39 = por %p37, %p38
    %p41 = scmp.ne.s32.totalorder %s24, %s40
    %p42 = scmp.eq.s32.totalorder %s16, 0
    %p43 = por %p41, %p42
    %s44 = sadd.s32 %s10, 1
    %s45 = smul.u32 %s44, 2
    %s46 = sadd.s32 %s17, 1
    %s47 = smul.u32 %s46, 2
    %s48 = ssub.s32 %s45, %s47
    %p49 = scmp.eq.s32.totalorder %s48, 0
    %s51 = sadd.s32 %s50, 1
    %s52 = scalar_select %p49, %s50, %s51
    %p55 = pneg %p49
    %p56 = scmp.eq.s32.totalorder %s10, 2
    %p57 = por %p55, %p56
    %p58 = scmp.ne.s32.totalorder %s50, %s53
    %p59 = scmp.eq.s32.totalorder %s10, 0
    %p60 = por %p58, %p59
    %p61 = scmp.ne.s32.totalorder %s50, %s53
    %p62 = scmp.eq.s32.totalorder %s15, 2
    %p63 = por %p61, %p62
    %p64 = scmp.ne.s32.totalorder %s53, %s54
    %p65 = scmp.eq.s32.totalorder %s15, 0
    %p66 = por %p64, %p65
    %p67 = scmp.ne.s32.totalorder %s53, %s54
    %p68 = scmp.eq.s32.totalorder %s16, 2
    %p69 = por %p67, %p68
    %p71 = scmp.ne.s32.totalorder %s54, %s70
    %p72 = scmp.eq.s32.totalorder %s16, 0
    %p73 = por %p71, %p72
    %s75 = sadd.s32 %s74, 1
    %p78 = scmp.eq.s32.totalorder %s10, 2
    %p79 = scmp.ne.s32.totalorder %s74, %s76
    %p80 = scmp.eq.s32.totalorder %s10, 0
    %p81 = por %p79, %p80
    %p82 = scmp.ne.s32.totalorder %s74, %s76
    %p83 = scmp.eq.s32.totalorder %s15, 2
    %p84 = por %p82, %p83
    %p85 = scmp.ne.s32.totalorder %s76, %s77
    %p86 = scmp.eq.s32.totalorder %s15, 0
    %p87 = por %p85, %p86
    %p88 = scmp.ne.s32.totalorder %s76, %s77
    %p89 = scmp.eq.s32.totalorder %s16, 2
    %p90 = por %p88, %p89
    %p92 = scmp.ne.s32.totalorder %s77, %s91
    %p93 = scmp.eq.s32.totalorder %s16, 0
    %p94 = por %p92, %p93
    %s96 = sadd.s32 %s95, 1
    %p99 = scmp.eq.s32.totalorder %s10, 2
    %p100 = scmp.ne.s32.totalorder %s95, %s97
    %p101 = scmp.eq.s32.totalorder %s10, 0
    %p102 = por %p100, %p101
    %p103 = scmp.ne.s32.totalorder %s95, %s97
    %p104 = scmp.eq.s32.totalorder %s15, 2
    %p105 = por %p103, %p104
    %p106 = scmp.ne.s32.totalorder %s97, %s98
    %p107 = scmp.eq.s32.totalorder %s15, 0
    %p108 = por %p106, %p107
    %p109 = scmp.ne.s32.totalorder %s97, %s98
    %p110 = scmp.eq.s32.totalorder %s16, 2
    %p111 = por %p109, %p110
    %p113 = scmp.ne.s32.totalorder %s98, %s112
    %p114 = scmp.eq.s32.totalorder %s16, 0
    %p115 = por %p113, %p114
    %s116 = ssub.s32 %s10, %s17
    %p117 = scmp.eq.s32.totalorder %s116, 0
    %s119 = sadd.s32 %s118, 1
    %s120 = scalar_select %p117, %s118, %s119
    %p123 = pneg %p117
    %p124 = scmp.eq.s32.totalorder %s10, 2
    %p125 = por %p123, %p124
    %p126 = scmp.ne.s32.totalorder %s118, %s121
    %p127 = scmp.eq.s32.totalorder %s10, 0
    %p128 = por %p126, %p127
    %p129 = scmp.ne.s32.totalorder %s118, %s121
    %p130 = scmp.eq.s32.totalorder %s15, 2
    %p131 = por %p129, %p130
    %p132 = scmp.ne.s32.totalorder %s121, %s122
    %p133 = scmp.eq.s32.totalorder %s15, 0
    %p134 = por %p132, %p133
    %p135 = scmp.ne.s32.totalorder %s121, %s122
    %p136 = scmp.eq.s32.totalorder %s16, 2
    %p137 = por %p135, %p136
    %p139 = scmp.ne.s32.totalorder %s122, %s138
    %p140 = scmp.eq.s32.totalorder %s16, 0
    %p141 = por %p139, %p140
    %p142 = scmp.le.s32.totalorder 1, %s10
    %p143 = scmp.lt.s32.totalorder %s10, 4
    %p144 = pnand %p142, %p143
    %p145 = pneg %p144
    // Predicated region
    $region9: #{basic_conv_forward.1} parent=5 // pred_check
      _
    $region10: #{basic_conv_forward.1} parent=5 // pred_check_branch
      %147 = sbr.rel (%p144) target = $region12
    $region11: #{basic_conv_forward.1} parent=5 // pred_region
      %s148 = ssub.s32 %s10, 1
      // Predicated region
      $region13: #{basic_conv_forward.1} parent=11 // pred_check
        %p149 = pneg %p87
      $region14: #{basic_conv_forward.1} parent=11 // pred_check_branch
        %151 = sbr.rel (%p149) target = $region16
      $region15: #{basic_conv_forward.1} parent=11 // pred_region
        _
      $region16: #{basic_conv_forward.1} parent=11 // pred_fallthru
        _
      // Predicated region
      $region17: #{basic_conv_forward.1} parent=11 // pred_check
        %p152 = pneg %p108
      $region18: #{basic_conv_forward.1} parent=11 // pred_check_branch
        %154 = sbr.rel (%p152) target = $region20
      $region19: #{basic_conv_forward.1} parent=11 // pred_region
        _
      $region20: #{basic_conv_forward.1} parent=11 // pred_fallthru
        _
    $region12: #{basic_conv_forward.1} parent=5 // pred_fallthru
      _
    %p155 = scmp.lt.s32.totalorder %s10, 3
    // Predicated region
    $region21: #{basic_conv_forward.1} parent=5 // pred_check
      %p156 = pneg %p155
    $region22: #{basic_conv_forward.1} parent=5 // pred_check_branch
      %158 = sbr.rel (%p156) target = $region24
    $region23: #{basic_conv_forward.1} parent=5 // pred_region
      // Predicated region
      $region25: #{basic_conv_forward.1} parent=23 // pred_check
        %p159 = pneg %p30
      $region26: #{basic_conv_forward.1} parent=23 // pred_check_branch
        %161 = sbr.rel (%p159) target = $region28
      $region27: #{basic_conv_forward.1} parent=23 // pred_region
        %s162 = smul.u32 2, %s10
        %p163 = scmp.lt.s32.totalorder %s162, 7
        %s164 = scalar_select %p163, %s162, 7
        %s165 = smul.addr %s164, 4
        %s166 = scalar_lea.vmem %s0, %s165
        %s167 = smul.u32 2, %s10
      $region28: #{basic_conv_forward.1} parent=23 // pred_fallthru
        _
      // Predicated region
      $region29: #{basic_conv_forward.1} parent=23 // pred_check
        %p168 = pneg %p60
      $region30: #{basic_conv_forward.1} parent=23 // pred_check_branch
        %170 = sbr.rel (%p168) target = $region32
      $region31: #{basic_conv_forward.1} parent=23 // pred_region
        %s171 = sadd.s32 %s10, 1
        %s172 = smul.u32 %s171, 2
        %p173 = scmp.lt.s32.totalorder %s172, 7
        %s174 = scalar_select %p173, %s172, 7
        %s175 = smul.addr %s174, 4
        %s176 = scalar_lea.vmem %s1, %s175
        %s177 = sadd.s32 %s10, 1
        %s178 = smul.u32 %s177, 2
      $region32: #{basic_conv_forward.1} parent=23 // pred_fallthru
        _
    $region24: #{basic_conv_forward.1} parent=5 // pred_fallthru
      _
    %p179 = scmp.le.s32.totalorder 1, %s10
    %p180 = scmp.lt.s32.totalorder %s10, 4
    %p181 = pnand %p179, %p180
    %p182 = pneg %p181
    // Predicated region
    $region33: #{basic_conv_forward.1} parent=5 // pred_check
      _
    $region34: #{basic_conv_forward.1} parent=5 // pred_check_branch
      %184 = sbr.rel (%p181) target = $region36
    $region35: #{basic_conv_forward.1} parent=5 // pred_region
      %s185 = ssub.s32 %s10, 1
      %s186 = smul.u32 2, %s15
      %p187 = scmp.lt.s32.totalorder %s186, 7
      %s188 = scalar_select %p187, %s186, 7
      %s189 = smul.addr %s188, 4
      %s190 = scalar_lea.vmem %s0, %s189
      %p191 = pneg %p36
      %p192 = pneg %p33
      %s193 = sadd.s32 %s15, 1
      %s194 = smul.u32 %s193, 2
      %p195 = scmp.lt.s32.totalorder %s194, 7
      %s196 = scalar_select %p195, %s194, 7
      %s197 = smul.addr %s196, 4
      %s198 = scalar_lea.vmem %s1, %s197
      %p199 = pneg %p66
      %p200 = pneg %p63
      %p201 = pneg %p87
      %p202 = pneg %p84
      %p203 = pneg %p108
      %p204 = pneg %p105
      %p205 = pneg %p134
      %p206 = pneg %p131
      %s207 = smul.u32 2, %s15
      %p208 = scmp.lt.s32.totalorder %s207, 5
      %s209 = scalar_select %p208, %s207, 5
      %s210 = smul.addr %s209, 8
      %s211 = scalar_lea.vmem %s4, %s210
      %s212 = smul.u32 2, %s15
      %p213 = scmp.lt.s32.totalorder %s212, 7
      %s214 = scalar_select %p213, %s212, 7
      %s215 = smul.addr %s214, 4
      %s216 = scalar_lea.vmem %s0, %s215
      %s217 = smul.u32 2, %s15
      %s218 = sadd.s32 %s15, 1
      %s219 = smul.u32 %s218, 2
      %p220 = scmp.lt.s32.totalorder %s219, 7
      %s221 = scalar_select %p220, %s219, 7
      %s222 = smul.addr %s221, 4
      %s223 = scalar_lea.vmem %s1, %s222
      %s224 = sadd.s32 %s15, 1
      %s225 = smul.u32 %s224, 2
      %s226 = smul.u32 2, %s15
      %p227 = scmp.lt.s32.totalorder %s226, 5
      %s228 = scalar_select %p227, %s226, 5
      %s229 = smul.addr %s228, 8
      %s230 = scalar_lea.vmem %s4, %s229
      %s231 = smul.u32 2, %s15
      %v233 = vld [vmem:[%s216] sm:$0xf]
      %v234 = vld [vmem:[%s216 + $0x4] sm:$0xf]
      %vm235 = vcmask 519168
      %236 = vst.msk [vmem:[#allocation2] sm:$0xf] %vm235, %v233
      %237 = vst.msk [vmem:[#allocation2 + $0x4] sm:$0xf] %vm235, %v234
      %v238 = vld [vmem:[%s223] sm:$0xf]
      %239 = vst.msk [vmem:[#allocation2 + $0x8] sm:$0xf] %vm235, %v238
      %v240 = vld [vmem:[#allocation2] sm:$0xf]
      %v241 = vld [vmem:[#allocation2 + $0x4] sm:$0xf]
      %242 = vst.msk [vmem:[#allocation3] sm:$0xf] %vm235, %v240
      %243 = vst.msk [vmem:[#allocation3 + $0x14] sm:$0xf] %vm235, %v241
      %v244 = vld [vmem:[#allocation2] sm:$0xf]
      %v245 = vld [vmem:[#allocation2 + $0x4] sm:$0xf]
      %248 = vrot.lane.b32.xlu0 %v244, 60
      %v249 = vpop.permute.xlu0 %248
      %250 = vrot.lane.b32.xlu0 %v245, 60
      %v251 = vpop.permute.xlu0 %250
      %vm254 = vcmask 1011200
      %255 = vst.msk [vmem:[#allocation3] sm:$0xf] %vm254, %v249
      %256 = vst.msk [vmem:[#allocation3 + $0x14] sm:$0xf] %vm254, %v251
      %v257 = vld [vmem:[#allocation2] sm:$0xf]
      %v258 = vld [vmem:[#allocation2 + $0x4] sm:$0xf]
      %v259 = vld [vmem:[#allocation2 + $0x8] sm:$0x1]
      %vm260 = vsmask.f32 3328
      %vm261 = vsmask.f32 7440
      %vm262 = vmor %vm260, %vm261
      %v264 = vshrl.u32 %v257, 16
      %v266 = vrot.slane %v264, 4
      %v267 = vshll.u32 %v257, 16
      %v269 = vrot.slane %v267, 5
      %v270 = vor.u32 %v266, %v269
      %v271 = vrot.slane %v270, 4
      %v273 = vshll.u32 %v258, 16
      %v275 = vrot.slane %v273, 5
      %v276 = vsel %vm262, %v271, %v275
      %v277 = vshrl.u32 %v258, 16
      %v279 = vrot.slane %v277, 4
      %v280 = vor.u32 %v279, %v275
      %v281 = vrot.slane %v280, 4
      %v283 = vshll.u32 %v259, 16
      %v285 = vrot.slane %v283, 5
      %v286 = vsel %vm262, %v281, %v285
      %287 = vrot.lane.b32.xlu0 %v276, 124
      %v288 = vpop.permute.xlu0 %287
      %289 = vrot.lane.b32.xlu0 %v286, 124
      %v290 = vpop.permute.xlu0 %289
      %vm293 = vcmask 1044448
      %294 = vst.msk [vmem:[#allocation3] sm:$0xf] %vm293, %v288
      %295 = vst.msk [vmem:[#allocation3 + $0x14] sm:$0xf] %vm293, %v290
      %v296 = vld [vmem:[#allocation2] sm:$0xf]
      %v297 = vld [vmem:[#allocation2 + $0x4] sm:$0xf]
      %300 = vrot.lane.b32.xlu0 %v296, 120
      %v301 = vpop.permute.xlu0 %300
      %302 = vrot.lane.b32.xlu0 %v297, 120
      %v303 = vpop.permute.xlu0 %302
      %vm306 = vcmask 453632
      %307 = vst.msk [vmem:[#allocation3 + $0x4] sm:$0xf] %vm306, %v301
      %308 = vst.msk [vmem:[#allocation3 + $0x18] sm:$0xf] %vm306, %v303
      %v309 = vld [vmem:[#allocation2] sm:$0xf]
      %v310 = vld [vmem:[#allocation2 + $0x4] sm:$0xf]
      %v311 = vld [vmem:[#allocation2 + $0x8] sm:$0x1]
      %v313 = vshrl.u32 %v309, 16
      %v315 = vrot.slane %v313, 4
      %v316 = vshll.u32 %v309, 16
      %v318 = vrot.slane %v316, 5
      %v319 = vor.u32 %v315, %v318
      %v320 = vrot.slane %v319, 4
      %v322 = vshll.u32 %v310, 16
      %v324 = vrot.slane %v322, 5
      %v325 = vsel %vm262, %v320, %v324
      %v326 = vshrl.u32 %v310, 16
      %v328 = vrot.slane %v326, 4
      %v329 = vor.u32 %v328, %v324
      %v330 = vrot.slane %v329, 4
      %v332 = vshll.u32 %v311, 16
      %v334 = vrot.slane %v332, 5
      %v335 = vsel %vm262, %v330, %v334
      %336 = vrot.lane.b32.xlu0 %v325, 56
      %v337 = vpop.permute.xlu0 %336
      %338 = vrot.lane.b32.xlu0 %v335, 56
      %v339 = vpop.permute.xlu0 %338
      %vm342 = vcmask 519616
      %343 = vst.msk [vmem:[#allocation3 + $0x4] sm:$0xf] %vm342, %v337
      %344 = vst.msk [vmem:[#allocation3 + $0x18] sm:$0xf] %vm342, %v339
      %v345 = vld [vmem:[#allocation2] sm:$0xf]
      %v346 = vld [vmem:[#allocation2 + $0x4] sm:$0xf]
      %v347 = vld [vmem:[#allocation2 + $0x8] sm:$0x1]
      %v349 = vshrl.u32 %v345, 16
      %v351 = vrot.slane %v349, 4
      %v352 = vshll.u32 %v345, 16
      %v354 = vrot.slane %v352, 5
      %v355 = vor.u32 %v351, %v354
      %v356 = vrot.slane %v355, 4
      %v358 = vshll.u32 %v346, 16
      %v360 = vrot.slane %v358, 5
      %v361 = vsel %vm262, %v356, %v360
      %v362 = vshrl.u32 %v346, 16
      %v364 = vrot.slane %v362, 4
      %v365 = vor.u32 %v364, %v360
      %v366 = vrot.slane %v365, 4
      %v368 = vshll.u32 %v347, 16
      %v370 = vrot.slane %v368, 5
      %v371 = vsel %vm262, %v366, %v370
      %372 = vrot.lane.b32.xlu0 %v361, 56
      %v373 = vpop.permute.xlu0 %372
      %374 = vrot.lane.b32.xlu0 %v371, 56
      %v375 = vpop.permute.xlu0 %374
      %vm378 = vcmask 978432
      %379 = vst.msk [vmem:[#allocation3 + $0x4] sm:$0xf] %vm378, %v373
      %380 = vst.msk [vmem:[#allocation3 + $0x18] sm:$0xf] %vm378, %v375
      %v381 = vld [vmem:[#allocation2] sm:$0xe]
      %v382 = vld [vmem:[#allocation2 + $0x4] sm:$0xf]
      %v383 = vld [vmem:[#allocation2 + $0x8] sm:$0x1]
      %vm387 = vcmask 1042432
      %vm388 = vcmask 1046532
      %vm389 = vmor %vm387, %vm388
      %v390 = vrot.slane %v381, 5
      %v391 = vrot.slane %v390, 4
      %v392 = vrot.slane %v382, 5
      %v393 = vsel %vm389, %v391, %v392
      %v394 = vrot.slane %v392, 4
      %v395 = vrot.slane %v383, 5
      %v396 = vsel %vm389, %v394, %v395
      %397 = vrot.lane.b32.xlu0 %v393, 120
      %v398 = vpop.permute.xlu0 %397
      %399 = vrot.lane.b32.xlu0 %v396, 120
      %v400 = vpop.permute.xlu0 %399
      %vm403 = vcmask 1044416
      %404 = vst.msk [vmem:[#allocation3 + $0x4] sm:$0xf] %vm403, %v398
      %405 = vst.msk [vmem:[#allocation3 + $0x18] sm:$0xf] %vm403, %v400
      %v406 = vld [vmem:[#allocation2] sm:$0xf]
      %v407 = vld [vmem:[#allocation2 + $0x4] sm:$0xf]
      %v408 = vld [vmem:[#allocation2 + $0x8] sm:$0x1]
      %v410 = vshrl.u32 %v406, 16
      %v412 = vrot.slane %v410, 4
      %v413 = vshll.u32 %v406, 16
      %v415 = vrot.slane %v413, 5
      %v416 = vor.u32 %v412, %v415
      %v417 = vrot.slane %v416, 4
      %v419 = vshll.u32 %v407, 16
      %v421 = vrot.slane %v419, 5
      %v422 = vsel %vm262, %v417, %v421
      %v423 = vshrl.u32 %v407, 16
      %v425 = vrot.slane %v423, 4
      %v426 = vor.u32 %v425, %v421
      %v427 = vrot.slane %v426, 4
      %v429 = vshll.u32 %v408, 16
      %v431 = vrot.slane %v429, 5
      %v432 = vsel %vm262, %v427, %v431
      %433 = vrot.lane.b32.xlu0 %v422, 116
      %v434 = vpop.permute.xlu0 %433
      %435 = vrot.lane.b32.xlu0 %v432, 116
      %v436 = vpop.permute.xlu0 %435
      %vm439 = vcmask 420864
      %440 = vst.msk [vmem:[#allocation3 + $0x8] sm:$0xf] %vm439, %v434
      %441 = vst.msk [vmem:[#allocation3 + $0x1c] sm:$0xf] %vm439, %v436
      %v442 = vld [vmem:[#allocation2] sm:$0xe]
      %v443 = vld [vmem:[#allocation2 + $0x4] sm:$0xf]
      %v444 = vld [vmem:[#allocation2 + $0x8] sm:$0x1]
      %v448 = vrot.slane %v442, 5
      %v449 = vrot.slane %v448, 4
      %v450 = vrot.slane %v443, 5
      %v451 = vsel %vm389, %v449, %v450
      %v452 = vrot.slane %v450, 4
      %v453 = vrot.slane %v444, 5
      %v454 = vsel %vm389, %v452, %v453
      %455 = vrot.lane.b32.xlu0 %v451, 52
      %v456 = vpop.permute.xlu0 %455
      %457 = vrot.lane.b32.xlu0 %v454, 52
      %v458 = vpop.permute.xlu0 %457
      %vm461 = vcmask 519584
      %462 = vst.msk [vmem:[#allocation3 + $0x8] sm:$0xf] %vm461, %v456
      %463 = vst.msk [vmem:[#allocation3 + $0x1c] sm:$0xf] %vm461, %v458
      %v464 = vld [vmem:[#allocation2] sm:$0xf]
      %v465 = vld [vmem:[#allocation2 + $0x4] sm:$0xf]
      %v466 = vld [vmem:[#allocation2 + $0x8] sm:$0x1]
      %v468 = vshrl.u32 %v464, 16
      %v470 = vrot.slane %v468, 4
      %v471 = vshll.u32 %v464, 16
      %v473 = vrot.slane %v471, 5
      %v474 = vor.u32 %v470, %v473
      %v475 = vrot.slane %v474, 4
      %v477 = vshll.u32 %v465, 16
      %v479 = vrot.slane %v477, 5
      %v480 = vsel %vm262, %v475, %v479
      %v481 = vshrl.u32 %v465, 16
      %v483 = vrot.slane %v481, 4
      %v484 = vor.u32 %v483, %v479
      %v485 = vrot.slane %v484, 4
      %v487 = vshll.u32 %v466, 16
      %v489 = vrot.slane %v487, 5
      %v490 = vsel %vm262, %v485, %v489
      %491 = vrot.lane.b32.xlu0 %v480, 48
      %v492 = vpop.permute.xlu0 %491
      %493 = vrot.lane.b32.xlu0 %v490, 48
      %v494 = vpop.permute.xlu0 %493
      %vm497 = vcmask 912896
      %498 = vst.msk [vmem:[#allocation3 + $0x8] sm:$0xf] %vm497, %v492
      %499 = vst.msk [vmem:[#allocation3 + $0x1c] sm:$0xf] %vm497, %v494
      %v500 = vld [vmem:[#allocation2] sm:$0xe]
      %v501 = vld [vmem:[#allocation2 + $0x4] sm:$0xf]
      %v502 = vld [vmem:[#allocation2 + $0x8] sm:$0x1]
      %v506 = vrot.slane %v500, 5
      %v507 = vrot.slane %v506, 4
      %v508 = vrot.slane %v501, 5
      %v509 = vsel %vm389, %v507, %v508
      %v510 = vrot.slane %v508, 4
      %v511 = vrot.slane %v502, 5
      %v512 = vsel %vm389, %v510, %v511
      %513 = vrot.lane.b32.xlu0 %v509, 112
      %v514 = vpop.permute.xlu0 %513
      %515 = vrot.lane.b32.xlu0 %v512, 112
      %v516 = vpop.permute.xlu0 %515
      %vm519 = vcmask 1044352
      %520 = vst.msk [vmem:[#allocation3 + $0x8] sm:$0xf] %vm519, %v514
      %521 = vst.msk [vmem:[#allocation3 + $0x1c] sm:$0xf] %vm519, %v516
      %v522 = vld [vmem:[#allocation2] sm:$0xe]
      %v523 = vld [vmem:[#allocation2 + $0x4] sm:$0xf]
      %v524 = vld [vmem:[#allocation2 + $0x8] sm:$0x1]
      %v528 = vrot.slane %v522, 5
      %v529 = vrot.slane %v528, 4
      %v530 = vrot.slane %v523, 5
      %v531 = vsel %vm389, %v529, %v530
      %v532 = vrot.slane %v530, 4
      %v533 = vrot.slane %v524, 5
      %v534 = vsel %vm389, %v532, %v533
      %535 = vrot.lane.b32.xlu0 %v531, 112
      %v536 = vpop.permute.xlu0 %535
      %537 = vrot.lane.b32.xlu0 %v534, 112
      %v538 = vpop.permute.xlu0 %537
      %vm541 = vcmask 388096
      %542 = vst.msk [vmem:[#allocation3 + $0xc] sm:$0xf] %vm541, %v536
      %543 = vst.msk [vmem:[#allocation3 + $0x20] sm:$0xf] %vm541, %v538
      %v544 = vld [vmem:[#allocation2] sm:$0xe]
      %v545 = vld [vmem:[#allocation2 + $0x4] sm:$0xf]
      %v546 = vld [vmem:[#allocation2 + $0x8] sm:$0x3]
      %vm547 = vsmask.f32 2304
      %vm548 = vsmask.f32 6416
      %vm549 = vmor %vm547, %vm548
      %v551 = vshrl.u32 %v544, 16
      %v553 = vrot.slane %v551, 5
      %v554 = vshll.u32 %v544, 16
      %v556 = vrot.slane %v554, 6
      %v557 = vor.u32 %v553, %v556
      %v558 = vrot.slane %v557, 4
      %v560 = vshrl.u32 %v545, 16
      %v562 = vrot.slane %v560, 5
      %v563 = vshll.u32 %v545, 16
      %v565 = vrot.slane %v563, 6
      %v566 = vor.u32 %v562, %v565
      %v567 = vsel %vm549, %v558, %v566
      %v568 = vrot.slane %v566, 4
      %v570 = vshrl.u32 %v546, 16
      %v572 = vrot.slane %v570, 5
      %v573 = vshll.u32 %v546, 16
      %v575 = vrot.slane %v573, 6
      %v576 = vor.u32 %v572, %v575
      %v577 = vsel %vm549, %v568, %v576
      %578 = vrot.lane.b32.xlu0 %v567, 48
      %v579 = vpop.permute.xlu0 %578
      %580 = vrot.lane.b32.xlu0 %v577, 48
      %v581 = vpop.permute.xlu0 %580
      %vm584 = vcmask 519552
      %585 = vst.msk [vmem:[#allocation3 + $0xc] sm:$0xf] %vm584, %v579
      %586 = vst.msk [vmem:[#allocation3 + $0x20] sm:$0xf] %vm584, %v581
      %v587 = vld [vmem:[#allocation2] sm:$0xe]
      %v588 = vld [vmem:[#allocation2 + $0x4] sm:$0xf]
      %v589 = vld [vmem:[#allocation2 + $0x8] sm:$0x1]
      %v593 = vrot.slane %v587, 5
      %v594 = vrot.slane %v593, 4
      %v595 = vrot.slane %v588, 5
      %v596 = vsel %vm389, %v594, %v595
      %v597 = vrot.slane %v595, 4
      %v598 = vrot.slane %v589, 5
      %v599 = vsel %vm389, %v597, %v598
      %600 = vrot.lane.b32.xlu0 %v596, 44
      %v601 = vpop.permute.xlu0 %600
      %602 = vrot.lane.b32.xlu0 %v599, 44
      %v603 = vpop.permute.xlu0 %602
      %vm606 = vcmask 880128
      %607 = vst.msk [vmem:[#allocation3 + $0xc] sm:$0xf] %vm606, %v601
      %608 = vst.msk [vmem:[#allocation3 + $0x20] sm:$0xf] %vm606, %v603
      %v609 = vld [vmem:[#allocation2] sm:$0xe]
      %v610 = vld [vmem:[#allocation2 + $0x4] sm:$0xf]
      %v611 = vld [vmem:[#allocation2 + $0x8] sm:$0x3]
      %v613 = vshrl.u32 %v609, 16
      %v615 = vrot.slane %v613, 5
      %v616 = vshll.u32 %v609, 16
      %v618 = vrot.slane %v616, 6
      %v619 = vor.u32 %v615, %v618
      %v620 = vrot.slane %v619, 4
      %v622 = vshrl.u32 %v610, 16
      %v624 = vrot.slane %v622, 5
      %v625 = vshll.u32 %v610, 16
      %v627 = vrot.slane %v625, 6
      %v628 = vor.u32 %v624, %v627
      %v629 = vsel %vm549, %v620, %v628
      %v630 = vrot.slane %v628, 4
      %v632 = vshrl.u32 %v611, 16
      %v634 = vrot.slane %v632, 5
      %v635 = vshll.u32 %v611, 16
      %v637 = vrot.slane %v635, 6
      %v638 = vor.u32 %v634, %v637
      %v639 = vsel %vm549, %v630, %v638
      %640 = vrot.lane.b32.xlu0 %v629, 108
      %v641 = vpop.permute.xlu0 %640
      %642 = vrot.lane.b32.xlu0 %v639, 108
      %v643 = vpop.permute.xlu0 %642
      %vm646 = vcmask 1044320
      %647 = vst.msk [vmem:[#allocation3 + $0xc] sm:$0xf] %vm646, %v641
      %648 = vst.msk [vmem:[#allocation3 + $0x20] sm:$0xf] %vm646, %v643
      %v649 = vld [vmem:[#allocation2] sm:$0xe]
      %v650 = vld [vmem:[#allocation2 + $0x4] sm:$0xf]
      %v651 = vld [vmem:[#allocation2 + $0x8] sm:$0x1]
      %v655 = vrot.slane %v649, 5
      %v656 = vrot.slane %v655, 4
      %v657 = vrot.slane %v650, 5
      %v658 = vsel %vm389, %v656, %v657
      %v659 = vrot.slane %v657, 4
      %v660 = vrot.slane %v651, 5
      %v661 = vsel %vm389, %v659, %v660
      %662 = vrot.lane.b32.xlu0 %v658, 104
      %v663 = vpop.permute.xlu0 %662
      %664 = vrot.lane.b32.xlu0 %v661, 104
      %v665 = vpop.permute.xlu0 %664
      %vm668 = vcmask 322560
      %669 = vst.msk [vmem:[#allocation3 + $0x10] sm:$0xf] %vm668, %v663
      %670 = vst.msk [vmem:[#allocation3 + $0x24] sm:$0xf] %vm668, %v665
      %v671 = vld [vmem:[#allocation2] sm:$0xe]
      %v672 = vld [vmem:[#allocation2 + $0x4] sm:$0xf]
      %v673 = vld [vmem:[#allocation2 + $0x8] sm:$0x3]
      %v675 = vshrl.u32 %v671, 16
      %v677 = vrot.slane %v675, 5
      %v678 = vshll.u32 %v671, 16
      %v680 = vrot.slane %v678, 6
      %v681 = vor.u32 %v677, %v680
      %v682 = vrot.slane %v681, 4
      %v684 = vshrl.u32 %v672, 16
      %v686 = vrot.slane %v684, 5
      %v687 = vshll.u32 %v672, 16
      %v689 = vrot.slane %v687, 6
      %v690 = vor.u32 %v686, %v689
      %v691 = vsel %vm549, %v682, %v690
      %v692 = vrot.slane %v690, 4
      %v694 = vshrl.u32 %v673, 16
      %v696 = vrot.slane %v694, 5
      %v697 = vshll.u32 %v673, 16
      %v699 = vrot.slane %v697, 6
      %v700 = vor.u32 %v696, %v699
      %v701 = vsel %vm549, %v692, %v700
      %702 = vrot.lane.b32.xlu0 %v691, 40
      %v703 = vpop.permute.xlu0 %702
      %704 = vrot.lane.b32.xlu0 %v701, 40
      %v705 = vpop.permute.xlu0 %704
      %vm708 = vcmask 519488
      %709 = vst.msk [vmem:[#allocation3 + $0x10] sm:$0xf] %vm708, %v703
      %710 = vst.msk [vmem:[#allocation3 + $0x24] sm:$0xf] %vm708, %v705
      %v711 = vld [vmem:[#allocation3] sm:$0xff]
      %v712 = vld [vmem:[#allocation3 + $0x8] sm:$0xff]
      %v713 = vld [vmem:[#allocation3 + $0x10] sm:$0xf]
      %v714 = vld [vmem:[#allocation3 + $0x14] sm:$0xff]
      %v715 = vld [vmem:[#allocation3 + $0x1c] sm:$0xff]
      %v716 = vld [vmem:[#allocation3 + $0x24] sm:$0xf]
      %v717 = vld [vmem:[%s2] sm:$0xf]
      %v718 = vld [vmem:[%s2 + $0x4] sm:$0xf]
      %v719 = vld [vmem:[%s2 + $0x8] sm:$0xf]
      %v720 = vld [vmem:[%s2 + $0xc] sm:$0xf]
      %v721 = vld [vmem:[%s2 + $0x10] sm:$0xf]
      %v722 = vld [vmem:[%s2 + $0x14] sm:$0xf]
      %v723 = vld [vmem:[%s2 + $0x18] sm:$0xf]
      %v724 = vld [vmem:[%s2 + $0x1c] sm:$0xf]
      %v725 = vld [vmem:[%s2 + $0x20] sm:$0xf]
      %v726 = vld [vmem:[%s2 + $0x24] sm:$0xf]
      %v727 = vld [vmem:[%s2 + $0x28] sm:$0xf]
      %v728 = vld [vmem:[%s2 + $0x2c] sm:$0xf]
      %v729 = vld [vmem:[%s2 + $0x30] sm:$0xf]
      %v730 = vld [vmem:[%s2 + $0x34] sm:$0xf]
      %v731 = vld [vmem:[%s2 + $0x38] sm:$0xf]
      %v732 = vld [vmem:[%s2 + $0x3c] sm:$0xf]
      %v733 = vld [vmem:[%s2 + $0x40] sm:$0xf]
      %v734 = vld [vmem:[%s2 + $0x44] sm:$0xf]
      %v735 = vld [vmem:[%s2 + $0x48] sm:$0xf]
      %v736 = vld [vmem:[%s2 + $0x4c] sm:$0xf]
      %v737 = vld [vmem:[%s2 + $0x50] sm:$0xf]
      %v738 = vld [vmem:[%s2 + $0x54] sm:$0xf]
      %v739 = vld [vmem:[%s2 + $0x58] sm:$0xf]
      %v740 = vld [vmem:[%s2 + $0x5c] sm:$0xf]
      %v741 = vld [vmem:[%s2 + $0x60] sm:$0xf]
      %v742 = vld [vmem:[%s2 + $0x64] sm:$0xf]
      %v743 = vld [vmem:[%s2 + $0x68] sm:$0xf]
      %v744 = vld [vmem:[%s2 + $0x6c] sm:$0xf]
      %v745 = vld [vmem:[%s2 + $0x70] sm:$0xf]
      %v746 = vld [vmem:[%s2 + $0x74] sm:$0xf]
      %v747 = vld [vmem:[%s2 + $0x78] sm:$0xf]
      %v748 = vld [vmem:[%s2 + $0x7c] sm:$0xf]
      %v749 = vld [vmem:[%s2 + $0x80] sm:$0xf]
      %v750 = vld [vmem:[%s2 + $0x84] sm:$0xf]
      %v751 = vld [vmem:[%s2 + $0x88] sm:$0xf]
      %v752 = vld [vmem:[%s2 + $0x8c] sm:$0xf]
      %v753 = vld [vmem:[%s2 + $0x90] sm:$0xf]
      %v754 = vld [vmem:[%s2 + $0x94] sm:$0xf]
      %v755 = vld [vmem:[%s2 + $0x98] sm:$0xf]
      %v756 = vld [vmem:[%s2 + $0x9c] sm:$0xf]
      %v757 = vld [vmem:[%s2 + $0xa0] sm:$0xf]
      %v758 = vld [vmem:[%s2 + $0xa4] sm:$0xf]
      %v759 = vld [vmem:[%s2 + $0xa8] sm:$0xf]
      %v760 = vld [vmem:[%s2 + $0xac] sm:$0xf]
      %v761 = vld [vmem:[%s2 + $0xb0] sm:$0xf]
      %v762 = vld [vmem:[%s2 + $0xb4] sm:$0xf]
      %v763 = vld [vmem:[%s2 + $0xb8] sm:$0xf]
      %v764 = vld [vmem:[%s2 + $0xbc] sm:$0xf]
      %v765 = vld [vmem:[%s2 + $0xc0] sm:$0xf]
      %v766 = vld [vmem:[%s2 + $0xc4] sm:$0xf]
      %v767 = vld [vmem:[%s2 + $0xc8] sm:$0xf]
      %v768 = vld [vmem:[%s2 + $0xcc] sm:$0xf]
      %v769 = vld [vmem:[%s2 + $0xd0] sm:$0xf]
      %v770 = vld [vmem:[%s2 + $0xd4] sm:$0xf]
      %v771 = vld [vmem:[%s2 + $0xd8] sm:$0xf]
      %v772 = vld [vmem:[%s2 + $0xdc] sm:$0xf]
      %v773 = vld [vmem:[%s2 + $0xe0] sm:$0xf]
      %v774 = vld [vmem:[%s2 + $0xe4] sm:$0xf]
      %v775 = vld [vmem:[%s2 + $0xe8] sm:$0xf]
      %v776 = vld [vmem:[%s2 + $0xec] sm:$0xf]
      %v777 = vld [vmem:[%s2 + $0xf0] sm:$0xf]
      %v778 = vld [vmem:[%s2 + $0xf4] sm:$0xf]
      %v779 = vld [vmem:[%s2 + $0xf8] sm:$0xf]
      %v780 = vld [vmem:[%s2 + $0xfc] sm:$0xf]
      %v781 = vld [vmem:[%s2 + $0x100] sm:$0xf]
      %v782 = vld [vmem:[%s2 + $0x104] sm:$0xf]
      %v783 = vld [vmem:[%s2 + $0x108] sm:$0xf]
      %v784 = vld [vmem:[%s2 + $0x10c] sm:$0xf]
      %v785 = vld [vmem:[%s2 + $0x110] sm:$0xf]
      %v786 = vld [vmem:[%s2 + $0x114] sm:$0xf]
      %v787 = vld [vmem:[%s2 + $0x118] sm:$0xf]
      %v788 = vld [vmem:[%s2 + $0x11c] sm:$0xf]
      %v789 = vld [vmem:[%s3] sm:$0x1]
      %v791 = vlaneseq
      %v792 = vshrl.u32 %v791, 7
      %v793 = vsub.s32 0, %v792
      %v794 = vrot.slane %v789, %v793
      %v802 = vunpack.c.l.b16 %v711
      %v803 = vunpack.c.h.b16 %v711
      %v804 = vunpack.c.l.b16 %v712
      %v805 = vunpack.c.h.b16 %v712
      %v806 = vunpack.c.l.b16 %v713
      %v807 = vunpack.c.l.b16 %v714
      %v808 = vunpack.c.h.b16 %v714
      %v809 = vunpack.c.l.b16 %v715
      %v810 = vunpack.c.h.b16 %v715
      %v811 = vunpack.c.l.b16 %v716
      %v812 = vpack.c.b16 %v807, %v802
      %v813 = vpack.c.b16 %v808, %v803
      %v814 = vpack.c.b16 %v809, %v804
      %v815 = vpack.c.b16 %v810, %v805
      %v816 = vpack.c.b16 %v811, %v806
      %v893 = vunpack.c.l.b16 %v717
      %v894 = vunpack.c.l.b16 %v718
      %v895 = vunpack.c.l.b16 %v719
      %v896 = vunpack.c.l.b16 %v720
      %v897 = vunpack.c.l.b16 %v721
      %v898 = vunpack.c.l.b16 %v722
      %v899 = vunpack.c.l.b16 %v723
      %v900 = vunpack.c.l.b16 %v724
      %v901 = vunpack.c.l.b16 %v725
      %v902 = vunpack.c.l.b16 %v726
      %v903 = vunpack.c.l.b16 %v727
      %v904 = vunpack.c.l.b16 %v728
      %v905 = vunpack.c.l.b16 %v729
      %v906 = vunpack.c.l.b16 %v730
      %v907 = vunpack.c.l.b16 %v731
      %v908 = vunpack.c.l.b16 %v732
      %v909 = vunpack.c.l.b16 %v733
      %v910 = vunpack.c.l.b16 %v734
      %v911 = vunpack.c.l.b16 %v735
      %v912 = vunpack.c.l.b16 %v736
      %v913 = vunpack.c.l.b16 %v737
      %v914 = vunpack.c.l.b16 %v738
      %v915 = vunpack.c.l.b16 %v739
      %v916 = vunpack.c.l.b16 %v740
      %v917 = vunpack.c.l.b16 %v741
      %v918 = vunpack.c.l.b16 %v742
      %v919 = vunpack.c.l.b16 %v743
      %v920 = vunpack.c.l.b16 %v744
      %v921 = vunpack.c.l.b16 %v745
      %v922 = vunpack.c.l.b16 %v746
      %v923 = vunpack.c.l.b16 %v747
      %v924 = vunpack.c.l.b16 %v748
      %v925 = vunpack.c.l.b16 %v749
      %v926 = vunpack.c.l.b16 %v750
      %v927 = vunpack.c.l.b16 %v751
      %v928 = vunpack.c.l.b16 %v752
      %v929 = vunpack.c.l.b16 %v753
      %v930 = vunpack.c.l.b16 %v754
      %v931 = vunpack.c.l.b16 %v755
      %v932 = vunpack.c.l.b16 %v756
      %v933 = vunpack.c.l.b16 %v757
      %v934 = vunpack.c.l.b16 %v758
      %v935 = vunpack.c.l.b16 %v759
      %v936 = vunpack.c.l.b16 %v760
      %v937 = vunpack.c.l.b16 %v761
      %v938 = vunpack.c.l.b16 %v762
      %v939 = vunpack.c.l.b16 %v763
      %v940 = vunpack.c.l.b16 %v764
      %v941 = vunpack.c.l.b16 %v765
      %v942 = vunpack.c.l.b16 %v766
      %v943 = vunpack.c.l.b16 %v767
      %v944 = vunpack.c.l.b16 %v768
      %v945 = vunpack.c.l.b16 %v769
      %v946 = vunpack.c.l.b16 %v770
      %v947 = vunpack.c.l.b16 %v771
      %v948 = vunpack.c.l.b16 %v772
      %v949 = vunpack.c.l.b16 %v773
      %v950 = vunpack.c.l.b16 %v774
      %v951 = vunpack.c.l.b16 %v775
      %v952 = vunpack.c.l.b16 %v776
      %v953 = vunpack.c.l.b16 %v777
      %v954 = vunpack.c.l.b16 %v778
      %v955 = vunpack.c.l.b16 %v779
      %v956 = vunpack.c.l.b16 %v780
      %v957 = vunpack.c.l.b16 %v781
      %v958 = vunpack.c.l.b16 %v782
      %v959 = vunpack.c.l.b16 %v783
      %v960 = vunpack.c.l.b16 %v784
      %v961 = vunpack.c.l.b16 %v785
      %v962 = vunpack.c.l.b16 %v786
      %v963 = vunpack.c.l.b16 %v787
      %v964 = vunpack.c.l.b16 %v788
      %v965 = vpack.c.b16 %v894, %v893
      %v966 = vpack.c.b16 %v896, %v895
      %v967 = vpack.c.b16 %v898, %v897
      %v968 = vpack.c.b16 %v900, %v899
      %v969 = vpack.c.b16 %v902, %v901
      %v970 = vpack.c.b16 %v904, %v903
      %v971 = vpack.c.b16 %v906, %v905
      %v972 = vpack.c.b16 %v908, %v907
      %v973 = vpack.c.b16 %v910, %v909
      %v974 = vpack.c.b16 %v912, %v911
      %v975 = vpack.c.b16 %v914, %v913
      %v976 = vpack.c.b16 %v916, %v915
      %v977 = vpack.c.b16 %v918, %v917
      %v978 = vpack.c.b16 %v920, %v919
      %v979 = vpack.c.b16 %v922, %v921
      %v980 = vpack.c.b16 %v924, %v923
      %v981 = vpack.c.b16 %v926, %v925
      %v982 = vpack.c.b16 %v928, %v927
      %v983 = vpack.c.b16 %v930, %v929
      %v984 = vpack.c.b16 %v932, %v931
      %v985 = vpack.c.b16 %v934, %v933
      %v986 = vpack.c.b16 %v936, %v935
      %v987 = vpack.c.b16 %v938, %v937
      %v988 = vpack.c.b16 %v940, %v939
      %v989 = vpack.c.b16 %v942, %v941
      %v990 = vpack.c.b16 %v944, %v943
      %v991 = vpack.c.b16 %v946, %v945
      %v992 = vpack.c.b16 %v948, %v947
      %v993 = vpack.c.b16 %v950, %v949
      %v994 = vpack.c.b16 %v952, %v951
      %v995 = vpack.c.b16 %v954, %v953
      %v996 = vpack.c.b16 %v956, %v955
      %v997 = vpack.c.b16 %v958, %v957
      %v998 = vpack.c.b16 %v960, %v959
      %v999 = vpack.c.b16 %v962, %v961
      %v1000 = vpack.c.b16 %v964, %v963
      %vm1037 = vcmask 523264
      %v1039 = vsel %vm1037, %v816, 0
      %1041 = vmatprep.subr.bf16.mxu0 0
      %1042 = vmatpush1.bf16.msra.mxu0 %v972
      %1043 = vmatprep.subr.bf16.mxu0 0
      %1044 = vmatpush1.bf16.msra.mxu0 %v971
      %1045 = vmatprep.subr.bf16.mxu0 0
      %1046 = vmatpush1.bf16.msra.mxu0 %v970
      %1047 = vmatprep.subr.bf16.mxu0 0
      %1048 = vmatpush1.bf16.msra.mxu0 %v969
      %1049 = vmatprep.subr.bf16.mxu0 0
      %1050 = vmatpush1.bf16.msra.mxu0 %v968
      %1051 = vmatprep.subr.bf16.mxu0 0
      %1052 = vmatpush1.bf16.msra.mxu0 %v967
      %1053 = vmatprep.subr.bf16.mxu0 0
      %1054 = vmatpush1.bf16.msra.mxu0 %v966
      %1055 = vmatprep.subr.bf16.mxu0 0
      %1056 = vmatpush1.bf16.msra.mxu0 %v965
      %1057 = vmatprep.subr.bf16.mxu0 0
      %1058 = vmatpush2.bf16.msra.mxu0 %v980
      %1059 = vmatprep.subr.bf16.mxu0 0
      %1060 = vmatpush2.bf16.msra.mxu0 %v979
      %1061 = vmatprep.subr.bf16.mxu0 0
      %1062 = vmatpush2.bf16.msra.mxu0 %v978
      %1063 = vmatprep.subr.bf16.mxu0 0
      %1064 = vmatpush2.bf16.msra.mxu0 %v977
      %1065 = vmatprep.subr.bf16.mxu0 0
      %1066 = vmatpush2.bf16.msra.mxu0 %v976
      %1067 = vmatprep.subr.bf16.mxu0 0
      %1068 = vmatpush2.bf16.msra.mxu0 %v975
      %1069 = vmatprep.subr.bf16.mxu0 0
      %1070 = vmatpush2.bf16.msra.mxu0 %v974
      %1071 = vmatprep.subr.bf16.mxu0 0
      %1072 = vmatpush2.bf16.msra.mxu0 %v973
      %1073 = vmatprep.mubr.bf16.mxu0 %v813
      %1074 = vmatmul.mubr.bf16.gmra.mxu0 %v812
      %v1075 = vpop.f32.mrf.mxu0
      %v1076 = vadd.f32 %v794, %v1075
      %v1077 = vpop.f32.mrf.mxu0
      %v1078 = vpop.f32.mrf.mxu0
      %v1079 = vadd.f32 %v794, %v1078
      %v1080 = vpop.f32.mrf.mxu0
      %1081 = vdwg.mxu0
      %1082 = vmatprep.subr.bf16.mxu0 0
      %1083 = vmatpush1.bf16.msra.mxu0 %v988
      %1084 = vmatprep.subr.bf16.mxu0 0
      %1085 = vmatpush1.bf16.msra.mxu0 %v987
      %1086 = vmatprep.subr.bf16.mxu0 0
      %1087 = vmatpush1.bf16.msra.mxu0 %v986
      %1088 = vmatprep.subr.bf16.mxu0 0
      %1089 = vmatpush1.bf16.msra.mxu0 %v985
      %1090 = vmatprep.subr.bf16.mxu0 0
      %1091 = vmatpush1.bf16.msra.mxu0 %v984
      %1092 = vmatprep.subr.bf16.mxu0 0
      %1093 = vmatpush1.bf16.msra.mxu0 %v983
      %1094 = vmatprep.subr.bf16.mxu0 0
      %1095 = vmatpush1.bf16.msra.mxu0 %v982
      %1096 = vmatprep.subr.bf16.mxu0 0
      %1097 = vmatpush1.bf16.msra.mxu0 %v981
      %1098 = vmatprep.subr.bf16.mxu0 0
      %1099 = vmatpush2.bf16.msra.mxu0 %v996
      %1100 = vmatprep.subr.bf16.mxu0 0
      %1101 = vmatpush2.bf16.msra.mxu0 %v995
      %1102 = vmatprep.subr.bf16.mxu0 0
      %1103 = vmatpush2.bf16.msra.mxu0 %v994
      %1104 = vmatprep.subr.bf16.mxu0 0
      %1105 = vmatpush2.bf16.msra.mxu0 %v993
      %1106 = vmatprep.subr.bf16.mxu0 0
      %1107 = vmatpush2.bf16.msra.mxu0 %v992
      %1108 = vmatprep.subr.bf16.mxu0 0
      %1109 = vmatpush2.bf16.msra.mxu0 %v991
      %1110 = vmatprep.subr.bf16.mxu0 0
      %1111 = vmatpush2.bf16.msra.mxu0 %v990
      %1112 = vmatprep.subr.bf16.mxu0 0
      %1113 = vmatpush2.bf16.msra.mxu0 %v989
      %1114 = vmatprep.mubr.bf16.mxu0 %v815
      %1115 = vmatmul.mubr.bf16.gmra.mxu0 %v814
      %v1116 = vpop.f32.mrf.mxu0
      %v1117 = vadd.f32 %v1076, %v1116
      %v1118 = vpop.f32.mrf.mxu0
      %v1119 = vpop.f32.mrf.mxu0
      %v1120 = vadd.f32 %v1079, %v1119
      %v1121 = vpop.f32.mrf.mxu0
      %1122 = vdwg.mxu0
      %1123 = vmatprep.subr.bf16.mxu0 0
      %1124 = vmatpush1.bf16.msra.mxu0 0
      %1125 = vmatprep.subr.bf16.mxu0 0
      %1126 = vmatpush1.bf16.msra.mxu0 0
      %1127 = vmatprep.subr.bf16.mxu0 0
      %1128 = vmatpush1.bf16.msra.mxu0 0
      %1129 = vmatprep.subr.bf16.mxu0 0
      %1130 = vmatpush1.bf16.msra.mxu0 0
      %1131 = vmatprep.subr.bf16.mxu0 0
      %1132 = vmatpush1.bf16.msra.mxu0 %v1000
      %1133 = vmatprep.subr.bf16.mxu0 0
      %1134 = vmatpush1.bf16.msra.mxu0 %v999
      %1135 = vmatprep.subr.bf16.mxu0 0
      %1136 = vmatpush1.bf16.msra.mxu0 %v998
      %1137 = vmatprep.subr.bf16.mxu0 0
      %1138 = vmatpush1.bf16.msra.mxu0 %v997
      %1139 = vmatprep.subr.bf16.mxu0 0
      %1140 = vmatpush2.bf16.msra.mxu0 0
      %1141 = vmatprep.subr.bf16.mxu0 0
      %1142 = vmatpush2.bf16.msra.mxu0 0
      %1143 = vmatprep.subr.bf16.mxu0 0
      %1144 = vmatpush2.bf16.msra.mxu0 0
      %1145 = vmatprep.subr.bf16.mxu0 0
      %1146 = vmatpush2.bf16.msra.mxu0 0
      %1147 = vmatprep.subr.bf16.mxu0 0
      %1148 = vmatpush2.bf16.msra.mxu0 0
      %1149 = vmatprep.subr.bf16.mxu0 0
      %1150 = vmatpush2.bf16.msra.mxu0 0
      %1151 = vmatprep.subr.bf16.mxu0 0
      %1152 = vmatpush2.bf16.msra.mxu0 0
      %1153 = vmatprep.subr.bf16.mxu0 0
      %1154 = vmatpush2.bf16.msra.mxu0 0
      %1155 = vmatprep.mubr.bf16.mxu0 0
      %1156 = vmatmul.mubr.bf16.gmra.mxu0 %v1039
      %v1157 = vpop.f32.mrf.mxu0
      %v1158 = vadd.f32 %v1117, %v1157
      %v1159 = vpop.f32.mrf.mxu0
      %v1160 = vpop.f32.mrf.mxu0
      %v1161 = vadd.f32 %v1120, %v1160
      %v1162 = vpop.f32.mrf.mxu0
      %1163 = vdwg.mxu0
      %v1164 = vmax.f32 %v1158, 0.0
      %v1165 = vmax.f32 %v1161, 0.0
      %1166 = vst [vmem:[%s230] sm:$0xff] %v1164
      %1167 = vst [vmem:[%s230 + $0x8] sm:$0xff] %v1165
      %s1168 = smul.u32 2, %s15
      %p1169 = scmp.lt.s32.totalorder %s1168, 5
      %s1170 = scalar_select %p1169, %s1168, 5
      %s1171 = smul.addr %s1170, 8
      %s1172 = scalar_lea.vmem %s4, %s1171
      // Predicated region
      $region37: #{basic_conv_forward.1} parent=35 // pred_check
        %p1173 = pneg %p131
      $region38: #{basic_conv_forward.1} parent=35 // pred_check_branch
        %1175 = sbr.rel (%p1173) target = $region40
      $region39: #{basic_conv_forward.1} parent=35 // pred_region
        %s1176 = smul.u32 2, %s15
      $region40: #{basic_conv_forward.1} parent=35 // pred_fallthru
        _
    $region36: #{basic_conv_forward.1} parent=5 // pred_fallthru
      _
    %p1177 = scmp.le.s32.totalorder 2, %s10
    // Predicated region
    $region41: #{basic_conv_forward.1} parent=5 // pred_check
      %p1178 = pneg %p1177
    $region42: #{basic_conv_forward.1} parent=5 // pred_check_branch
      %1180 = sbr.rel (%p1178) target = $region44
    $region43: #{basic_conv_forward.1} parent=5 // pred_region
      %s1181 = ssub.s32 %s10, 2
      // Predicated region
      $region45: #{basic_conv_forward.1} parent=43 // pred_check
        %p1182 = pneg %p137
      $region46: #{basic_conv_forward.1} parent=43 // pred_check_branch
        %1184 = sbr.rel (%p1182) target = $region48
      $region47: #{basic_conv_forward.1} parent=43 // pred_region
        %s1185 = smul.u32 2, %s16
        %p1186 = scmp.lt.s32.totalorder %s1185, 5
        %s1187 = scalar_select %p1186, %s1185, 5
        %s1188 = smul.addr %s1187, 8
        %s1189 = scalar_lea.vmem %s4, %s1188
      $region48: #{basic_conv_forward.1} parent=43 // pred_fallthru
        _
    $region44: #{basic_conv_forward.1} parent=5 // pred_fallthru
      _
  $region6: #{basic_conv_forward.1} parent=0 // loop_footer
    %s14 = sadd.s32 1, %s10
  $region7: #{basic_conv_forward.1} parent=0 // loop_footer_branch
    %9 = sbr.rel target = $region3
  $region8: #{basic_conv_forward.1} parent=0 // loop_exit
    _

</llo_original>
